<compile_context>
chip_gen: v7x
topology: tpu7x:2x2x1
jax: 0.10.0
libtpu: 0.0.40
codegen_flags: <defaults>
</compile_context>

<pallas_src>
import functools

import jax
import jax.numpy as jnp
import numpy as np
from jax.experimental import pallas as pl
from jax.experimental.pallas import tpu as pltpu


# ---------------------------------------------------------------------------
# Small static helpers (tile choice, VMEM accounting).
# ---------------------------------------------------------------------------
def _cdiv(a, b):
    return -(-a // b)


def _round_up(x, m):
    return _cdiv(x, m) * m


def _vmem_cap_bytes():
    """~75% of physical VMEM (96 MiB on v5e/v6e, 48 MiB on v7x); safe fallback 48 MiB."""
    try:
        cap = int(pltpu.get_tpu_info().vmem_capacity_bytes)
    except Exception:
        cap = 64 * 1024 * 1024
    return (cap * 3) // 4


def _vmem_limit_bytes(estimate, cap):
    """Keep the default scoped limit for small working sets; otherwise raise it with headroom."""
    if estimate <= 24 * 1024 * 1024:
        return None
    return int(min(cap, estimate + 16 * 1024 * 1024))


def _tile_bytes(shape, dtype):
    """Bytes of ONE VMEM buffer of a 2-D block, including (sublane, lane) padding."""
    itemsize = jnp.dtype(dtype).itemsize
    sublane = 32 // itemsize            # 8 for f32, 16 for bf16, 32 for int8/fp8
    r, c = shape
    return _round_up(max(r, 1), sublane) * _round_up(max(c, 1), 128) * itemsize


def _pass1_vmem(bv, be, Cin, Cout, reassoc):
    """Pass-1 VMEM estimate: double-buffered inputs & output + f32 accumulator."""
    if reassoc:
        return (2 * _tile_bytes((be, bv), jnp.bfloat16)      # H^T block
                + 2 * _tile_bytes((bv, Cin), jnp.bfloat16)   # X block
                + 2 * _tile_bytes((Cin, Cout), jnp.float32)  # W
                + 2 * _tile_bytes((1, Cout), jnp.float32)    # b
                + 2 * _tile_bytes((be, 1), jnp.float32)      # inv_de (lane-padded!)
                + 2 * _tile_bytes((be, Cout), jnp.bfloat16)  # Y out
                + _tile_bytes((be, Cin), jnp.float32))       # accumulator
    return (2 * _tile_bytes((be, bv), jnp.bfloat16)
            + 2 * _tile_bytes((bv, Cout), jnp.bfloat16)      # X' block
            + 2 * _tile_bytes((be, 1), jnp.float32)
            + 2 * _tile_bytes((be, Cout), jnp.bfloat16)
            + _tile_bytes((be, Cout), jnp.float32))


def _pass2_vmem(bv, be, Cout, out_dtype):
    return (2 * _tile_bytes((bv, be), jnp.bfloat16)          # H block
            + 2 * _tile_bytes((be, Cout), jnp.bfloat16)      # Y block
            + 2 * _tile_bytes((bv, 1), jnp.float32)          # inv_dv
            + 2 * _tile_bytes((bv, Cout), out_dtype)         # output
            + _tile_bytes((bv, Cout), jnp.float32))          # accumulator


def _choose_tile(n, target):
    """Full extent if n <= target, else a 128-multiple ~= n / nblocks (rows get zero-padded)."""
    if n <= target:
        return n
    nblk = _cdiv(n, target)
    return _round_up(_cdiv(n, nblk), 128)


def _fit_tiles(Nv, Ne, Cin, Cout, out_dtype, cap, reassoc):
    """Pick (bv, be): big tiles on 128-MiB parts, smaller (and megacore-friendly) on v7x."""
    budget = int(0.85 * cap)
    big_vmem = cap > 64 * 1024 * 1024          # v5e / v6e (128 MiB physical VMEM)
    tgt_v = 2048 if big_vmem else 1024
    tgt_e = 2048 if big_vmem else 1024
    if not big_vmem:
        # v7x has 2 TensorCores: keep >= 2 blocks on each 'parallel' axis when possible.
        if Ne > 256:
            tgt_e = min(tgt_e, _round_up(_cdiv(Ne, 2), 128))
        if Nv > 256:
            tgt_v = min(tgt_v, _round_up(_cdiv(Nv, 2), 128))
    while True:
        bv = _choose_tile(Nv, tgt_v)
        be = _choose_tile(Ne, tgt_e)
        est = max(_pass1_vmem(bv, be, Cin, Cout, reassoc),
                  _pass2_vmem(bv, be, Cout, out_dtype))
        if est <= budget or (tgt_v <= 128 and tgt_e <= 128):
            return bv, be
        if tgt_v >= tgt_e and tgt_v > 128:
            tgt_v = max(128, tgt_v // 2)
        else:
            tgt_e = max(128, tgt_e // 2)


# ---------------------------------------------------------------------------
# Kernel 1a (Cin <= Cout): vertex->edge aggregation with theta reassociated.
#   grid = (edge blocks, vertex blocks); vertex axis is the reduction (last).
#   Inner loop: acc(be, Cin) += H^T_block(be, bv) @ X_block(bv, Cin)   (bf16 MXU, f32 acc)
#   Finalize : Y = (acc @ W) * inv_de + b   (bias only for non-empty edges)
# ---------------------------------------------------------------------------
def _v2e_reassoc_kernel(ht_ref, x_ref, w_ref, b_ref, inv_de_ref, y_ref, acc_ref):
    v = pl.program_id(1)

    @pl.when(v == 0)
    def _():
        acc_ref[...] = jnp.zeros_like(acc_ref)

    acc_ref[...] += jnp.dot(ht_ref[...], x_ref[...],
                            preferred_element_type=jnp.float32)

    @pl.when(v == pl.num_programs(1) - 1)
    def _():
        inv_de = inv_de_ref[...]
        # theta applied once per edge block (f32, negligible vs. the inner loop)
        xw = jnp.dot(acc_ref[...], w_ref[...], preferred_element_type=jnp.float32)
        mask = (inv_de > 0.0).astype(jnp.float32)       # empty (or padded) edges -> 0
        y_ref[...] = (xw * inv_de + b_ref[...] * mask).astype(y_ref.dtype)


# ---------------------------------------------------------------------------
# Kernel 1b (Cin > Cout): vertex->edge mean aggregation of the pre-computed X'.
# ---------------------------------------------------------------------------
def _v2e_kernel(ht_ref, xp_ref, inv_de_ref, y_ref, acc_ref):
    v = pl.program_id(1)

    @pl.when(v == 0)
    def _():
        acc_ref[...] = jnp.zeros_like(acc_ref)

    acc_ref[...] += jnp.dot(ht_ref[...], xp_ref[...],
                            preferred_element_type=jnp.float32)

    @pl.when(v == pl.num_programs(1) - 1)
    def _():
        y_ref[...] = (acc_ref[...] * inv_de_ref[...]).astype(y_ref.dtype)


# ---------------------------------------------------------------------------
# Kernel 2: edge->vertex mean aggregation + ReLU (if not is_last).
#   grid = (vertex blocks, edge blocks); edge axis is the reduction (last).
# ---------------------------------------------------------------------------
def _e2v_kernel(h_ref, y_ref, inv_dv_ref, o_ref, acc_ref, *, apply_relu):
    e = pl.program_id(1)

    @pl.when(e == 0)
    def _():
        acc_ref[...] = jnp.zeros_like(acc_ref)

    acc_ref[...] += jnp.dot(h_ref[...], y_ref[...],
                            preferred_element_type=jnp.float32)

    @pl.when(e == pl.num_programs(1) - 1)
    def _():
        out = acc_ref[...] * inv_dv_ref[...]            # finalize math stays f32
        if apply_relu:
            out = jnp.maximum(out, 0.0)
        o_ref[...] = out.astype(o_ref.dtype)


def hgnnp_conv(X, H, W, b, *, is_last=False, bv=None, be=None):
    """HGNNPConv forward: act(D_v^-1 H D_e^-1 H^T (X W + b)); act skipped if is_last.

    Optional bv / be overrides must be multiples of 128 (or >= the axis size).
    """
    Nv, Cin = X.shape
    Ne = H.shape[1]
    Cout = W.shape[1]
    assert H.shape[0] == Nv and W.shape[0] == Cin and b.shape == (1, Cout)
    out_dtype = X.dtype

    # Hypergraph degrees for 'mean' aggregation; guard empty edges / isolated vertices.
    Hf = H.astype(jnp.float32)
    de = jnp.sum(Hf, axis=0)
    dv = jnp.sum(Hf, axis=1)
    inv_de = jnp.where(de > 0, 1.0 / de, 0.0).reshape(Ne, 1).astype(jnp.float32)
    inv_dv = jnp.where(dv > 0, 1.0 / dv, 0.0).reshape(Nv, 1).astype(jnp.float32)

    cap = _vmem_cap_bytes()
    reassoc = Cin <= Cout                # fold theta into the pass-1 finalize step

    if bv is None or be is None:
        auto_bv, auto_be = _fit_tiles(Nv, Ne, Cin, Cout, out_dtype, cap, reassoc)
        bv = auto_bv if bv is None else bv
        be = auto_be if be is None else be

    Nv_p = _cdiv(Nv, bv) * bv
    Ne_p = _cdiv(Ne, be) * be

    # Zero-pad ragged sizes: padded vertices/edges have degree 0 -> exact no-ops.
    if Nv_p != Nv or Ne_p != Ne:
        Hf = jnp.pad(Hf, ((0, Nv_p - Nv), (0, Ne_p - Ne)))
        X = jnp.pad(X, ((0, Nv_p - Nv), (0, 0)))
        inv_de = jnp.pad(inv_de, ((0, Ne_p - Ne), (0, 0)))
        inv_dv = jnp.pad(inv_dv, ((0, Nv_p - Nv), (0, 0)))

    # 0/1 incidence is exact in bf16; halves the dominant HBM traffic (H read twice).
    Hb = Hf.astype(jnp.bfloat16)         # (Nv_p, Ne_p) for pass 2
    HTb = Hb.T                           # (Ne_p, Nv_p) for pass 1 (no in-kernel transpose)
    W32 = W.astype(jnp.float32)
    b32 = b.astype(jnp.float32)

    # ---- pass 1: edge features Y = D_e^-1 H^T (X W + b)  (bf16 output) ----
    est1 = _pass1_vmem(bv, be, Cin, Cout, reassoc)
    if reassoc:
        y = pl.pallas_call(
            _v2e_reassoc_kernel,
            out_shape=jax.ShapeDtypeStruct((Ne_p, Cout), jnp.bfloat16),
            grid_spec=pltpu.PrefetchScalarGridSpec(
                num_scalar_prefetch=0,
                grid=(Ne_p // be, Nv_p // bv),            # reduction (vertices) last
                in_specs=[
                    pl.BlockSpec((be, bv), lambda e, v: (e, v)),
                    pl.BlockSpec((bv, Cin), lambda e, v: (v, 0)),
                    pl.BlockSpec((Cin, Cout), lambda e, v: (0, 0)),
                    pl.BlockSpec((1, Cout), lambda e, v: (0, 0)),
                    pl.BlockSpec((be, 1), lambda e, v: (e, 0)),
                ],
                out_specs=pl.BlockSpec((be, Cout), lambda e, v: (e, 0)),
                scratch_shapes=[pltpu.VMEM((be, Cin), jnp.float32)],
            ),
            compiler_params=pltpu.CompilerParams(
                dimension_semantics=("parallel", "arbitrary"),
                vmem_limit_bytes=_vmem_limit_bytes(est1, cap)),
        )(HTb, X.astype(jnp.bfloat16), W32, b32, inv_de)
    else:
        # Cin > Cout: apply theta once up front (plain XLA matmul), aggregate X' in-kernel.
        Xp = (X.astype(jnp.float32) @ W32 + b32).astype(jnp.bfloat16)
        y = pl.pallas_call(
            _v2e_kernel,
            out_shape=jax.ShapeDtypeStruct((Ne_p, Cout), jnp.bfloat16),
            grid_spec=pltpu.PrefetchScalarGridSpec(
                num_scalar_prefetch=0,
                grid=(Ne_p // be, Nv_p // bv),
                in_specs=[
                    pl.BlockSpec((be, bv), lambda e, v: (e, v)),
                    pl.BlockSpec((bv, Cout), lambda e, v: (v, 0)),
                    pl.BlockSpec((be, 1), lambda e, v: (e, 0)),
                ],
                out_specs=pl.BlockSpec((be, Cout), lambda e, v: (e, 0)),
                scratch_shapes=[pltpu.VMEM((be, Cout), jnp.float32)],
            ),
            compiler_params=pltpu.CompilerParams(
                dimension_semantics=("parallel", "arbitrary"),
                vmem_limit_bytes=_vmem_limit_bytes(est1, cap)),
        )(HTb, Xp, inv_de)

    # ---- pass 2: vertex output = act(D_v^-1 H Y) ----
    est2 = _pass2_vmem(bv, be, Cout, out_dtype)
    out = pl.pallas_call(
        functools.partial(_e2v_kernel, apply_relu=not is_last),
        out_shape=jax.ShapeDtypeStruct((Nv_p, Cout), out_dtype),
        grid_spec=pltpu.PrefetchScalarGridSpec(
            num_scalar_prefetch=0,
            grid=(Nv_p // bv, Ne_p // be),                # reduction (edges) last
            in_specs=[
                pl.BlockSpec((bv, be), lambda v, e: (v, e)),
                pl.BlockSpec((be, Cout), lambda v, e: (e, 0)),
                pl.BlockSpec((bv, 1), lambda v, e: (v, 0)),
            ],
            out_specs=pl.BlockSpec((bv, Cout), lambda v, e: (v, 0)),
            scratch_shapes=[pltpu.VMEM((bv, Cout), jnp.float32)],
        ),
        compiler_params=pltpu.CompilerParams(
            dimension_semantics=("parallel", "arbitrary"),
            vmem_limit_bytes=_vmem_limit_bytes(est2, cap)),
    )(Hb, y, inv_dv)

    return out[:Nv] if Nv_p != Nv else out


def hgnnp_conv_ref(X, H, W, b, *, is_last=False):
    """Pure-JAX f32 reference mirroring the PyTorch forward (eval mode, use_bn=False)."""
    Xt = X @ W + b
    de = H.sum(axis=0)
    dv = H.sum(axis=1)
    inv_de = jnp.where(de > 0, 1.0 / de, 0.0)
    inv_dv = jnp.where(dv > 0, 1.0 / dv, 0.0)
    Y = (H.T @ Xt) * inv_de[:, None]      # v2e mean
    Z = (H @ Y) * inv_dv[:, None]         # e2v mean
    return Z if is_last else jnp.maximum(Z, 0.0)


if __name__ == "__main__":
    Cin, Cout = 32, 128

    def run_case(Nv, Ne, bv, be, is_last):
        key = jax.random.PRNGKey(0)
        k_x, k_h, k_w, k_b = jax.random.split(key, 4)
        X = jax.random.normal(k_x, (Nv, Cin), dtype=jnp.float32)
        H = (jax.random.uniform(k_h, (Nv, Ne)) < 0.3).astype(jnp.float32)
        # nn.Linear-style uniform(-1/sqrt(fan_in), 1/sqrt(fan_in)) init.
        bound = 1.0 / np.sqrt(Cin)
        W = jax.random.uniform(k_w, (Cin, Cout), jnp.float32, -bound, bound)
        b = jax.random.uniform(k_b, (1, Cout), jnp.float32, -bound, bound)

        out = jax.block_until_ready(hgnnp_conv(X, H, W, b, is_last=is_last, bv=bv, be=be))
        ref = jax.block_until_ready(hgnnp_conv_ref(X, H, W, b, is_last=is_last))
        # bf16 X / Y on the kernel path vs. f32 reference -> loosened tolerance.
        np.testing.assert_allclose(np.asarray(out), np.asarray(ref), rtol=5e-2, atol=5e-3)

    # Multi-block grids on both passes (2 edge blocks x 2 vertex blocks), ReLU path.
    run_case(Nv=256, Ne=256, bv=128, be=128, is_last=False)
    # Non-divisible sizes -> zero-padding path; last-layer (no activation) path.
    run_case(Nv=200, Ne=144, bv=128, be=128, is_last=True)

    print("KERNEL_OK")
</pallas_src>

<mosaic_0001>
module attributes {stable_mosaic.version = 11 : i64} {
  func.func @_v2e_reassoc_kernel(%arg0: i32, %arg1: i32, %arg2: memref<128x128xbf16, #tpu.memory_space<vmem>>, %arg3: memref<128x32xbf16, #tpu.memory_space<vmem>>, %arg4: memref<32x128xf32, #tpu.memory_space<vmem>>, %arg5: memref<1x128xf32, #tpu.memory_space<vmem>>, %arg6: memref<128x1xf32, #tpu.memory_space<vmem>>, %arg7: memref<128x128xbf16, #tpu.memory_space<vmem>>, %arg8: memref<128x32xf32, #tpu.memory_space<vmem>>) attributes {dimension_semantics = [#tpu.dimension_semantics<parallel>, #tpu.dimension_semantics<arbitrary>], iteration_bounds = array<i64: 2, 2>, scalar_prefetch = 0 : i64, scratch_operands = 1 : i64, tpu.core_type = #tpu.core_type<tc>, window_params = [{transform_indices = @transform_0, window_bounds = array<i64: 128, 128>}, {transform_indices = @transform_1, window_bounds = array<i64: 128, 32>}, {pipeline_mode = #tpu.pipeline_mode<synchronous>, transform_indices = @transform_2, window_bounds = array<i64: 32, 128>}, {pipeline_mode = #tpu.pipeline_mode<synchronous>, transform_indices = @transform_3, window_bounds = array<i64: 1, 128>}, {transform_indices = @transform_4, window_bounds = array<i64: 128, 1>}, {transform_indices = @transform_5, window_bounds = array<i64: 128, 128>}]} {
    %c0_i32 = arith.constant 0 : i32
    %0 = arith.cmpi eq, %arg1, %c0_i32 : i32
    %1 = arith.extui %0 : i1 to i32
    %c0_i32_0 = arith.constant 0 : i32
    %2 = arith.cmpi ne, %1, %c0_i32_0 : i32
    scf.if %2 {
      %cst_9 = arith.constant 0.000000e+00 : f32
      %12 = vector.broadcast %cst_9 : f32 to vector<128x32xf32>
      %c0_10 = arith.constant 0 : index
      %c0_11 = arith.constant 0 : index
      %13 = vector.load %arg8[%c0_10, %c0_11] : memref<128x32xf32, #tpu.memory_space<vmem>>, vector<128x32xf32>
      tpu.vector_store %arg8[%c0_10, %c0_11], %12 {strides = array<i32>} : memref<128x32xf32, #tpu.memory_space<vmem>>, vector<128x32xf32>,
    } else {
    }
    %c0 = arith.constant 0 : index
    %c0_1 = arith.constant 0 : index
    %3 = vector.load %arg8[%c0, %c0_1] : memref<128x32xf32, #tpu.memory_space<vmem>>, vector<128x32xf32>
    %c0_2 = arith.constant 0 : index
    %c0_3 = arith.constant 0 : index
    %4 = vector.load %arg2[%c0_2, %c0_3] : memref<128x128xbf16, #tpu.memory_space<vmem>>, vector<128x128xbf16>
    %c0_4 = arith.constant 0 : index
    %c0_5 = arith.constant 0 : index
    %5 = vector.load %arg3[%c0_4, %c0_5] : memref<128x32xbf16, #tpu.memory_space<vmem>>, vector<128x32xbf16>
    %cst = arith.constant dense<0.000000e+00> : vector<128x32xf32>
    %6 = tpu.matmul %4, %5, %cst {dimension_numbers = #tpu.dot_dimension_numbers<[1], [0], [0], [1], [0, 0, 1, 1], [], []>} : vector<128x128xbf16>, vector<128x32xbf16>, vector<128x32xf32> -> vector<128x32xf32>
    %7 = arith.addf %3, %6 : vector<128x32xf32>
    %c0_6 = arith.constant 0 : index
    %c0_7 = arith.constant 0 : index
    %8 = vector.load %arg8[%c0_6, %c0_7] : memref<128x32xf32, #tpu.memory_space<vmem>>, vector<128x32xf32>
    tpu.vector_store %arg8[%c0_6, %c0_7], %7 {strides = array<i32>} : memref<128x32xf32, #tpu.memory_space<vmem>>, vector<128x32xf32>,
    %c1_i32 = arith.constant 1 : i32
    %9 = arith.cmpi eq, %arg1, %c1_i32 : i32
    %10 = arith.extui %9 : i1 to i32
    %c0_i32_8 = arith.constant 0 : i32
    %11 = arith.cmpi ne, %10, %c0_i32_8 : i32
    scf.if %11 {
      %c0_9 = arith.constant 0 : index
      %c0_10 = arith.constant 0 : index
      %12 = vector.load %arg6[%c0_9, %c0_10] : memref<128x1xf32, #tpu.memory_space<vmem>>, vector<128x1xf32>
      %c0_11 = arith.constant 0 : index
      %c0_12 = arith.constant 0 : index
      %13 = vector.load %arg8[%c0_11, %c0_12] : memref<128x32xf32, #tpu.memory_space<vmem>>, vector<128x32xf32>
      %c0_13 = arith.constant 0 : index
      %c0_14 = arith.constant 0 : index
      %14 = vector.load %arg4[%c0_13, %c0_14] : memref<32x128xf32, #tpu.memory_space<vmem>>, vector<32x128xf32>
      %cst_15 = arith.constant dense<0.000000e+00> : vector<128x128xf32>
      %15 = tpu.matmul %13, %14, %cst_15 {dimension_numbers = #tpu.dot_dimension_numbers<[1], [0], [0], [1], [0, 0, 1, 1], [], []>} : vector<128x32xf32>, vector<32x128xf32>, vector<128x128xf32> -> vector<128x128xf32>
      %cst_16 = arith.constant 0.000000e+00 : f32
      %16 = vector.broadcast %cst_16 : f32 to vector<128x1xf32>
      %17 = arith.cmpf ogt, %12, %16 : vector<128x1xf32>
      %18 = arith.extui %17 : vector<128x1xi1> to vector<128x1xi32>
      %19 = arith.sitofp %18 : vector<128x1xi32> to vector<128x1xf32>
      %20 = vector.broadcast %12 : vector<128x1xf32> to vector<128x128xf32>
      %21 = arith.mulf %15, %20 : vector<128x128xf32>
      %c0_17 = arith.constant 0 : index
      %c0_18 = arith.constant 0 : index
      %22 = vector.load %arg5[%c0_17, %c0_18] : memref<1x128xf32, #tpu.memory_space<vmem>>, vector<1x128xf32>
      %23 = vector.broadcast %22 : vector<1x128xf32> to vector<128x128xf32>
      %24 = vector.broadcast %19 : vector<128x1xf32> to vector<128x128xf32>
      %25 = arith.mulf %23, %24 : vector<128x128xf32>
      %26 = arith.addf %21, %25 : vector<128x128xf32>
      %27 = arith.truncf %26 : vector<128x128xf32> to vector<128x128xbf16>
      %c0_19 = arith.constant 0 : index
      %c0_20 = arith.constant 0 : index
      %28 = vector.load %arg7[%c0_19, %c0_20] : memref<128x128xbf16, #tpu.memory_space<vmem>>, vector<128x128xbf16>
      tpu.vector_store %arg7[%c0_19, %c0_20], %27 {strides = array<i32>} : memref<128x128xbf16, #tpu.memory_space<vmem>>, vector<128x128xbf16>,
    } else {
    }
    return
  }
  func.func @transform_0(%arg0: i32, %arg1: i32) -> (i32, i32) {
    %c0_i32 = arith.constant 0 : i32
    return %arg0, %arg1 : i32, i32
  }
  func.func @transform_1(%arg0: i32, %arg1: i32) -> (i32, i32) {
    %c0_i32 = arith.constant 0 : i32
    %c0_i32_0 = arith.constant 0 : i32
    return %arg1, %c0_i32 : i32, i32
  }
  func.func @transform_2(%arg0: i32, %arg1: i32) -> (i32, i32) {
    %c0_i32 = arith.constant 0 : i32
    %c0_i32_0 = arith.constant 0 : i32
    %c0_i32_1 = arith.constant 0 : i32
    return %c0_i32, %c0_i32_0 : i32, i32
  }
  func.func @transform_3(%arg0: i32, %arg1: i32) -> (i32, i32) {
    %c0_i32 = arith.constant 0 : i32
    %c0_i32_0 = arith.constant 0 : i32
    %c0_i32_1 = arith.constant 0 : i32
    return %c0_i32, %c0_i32_0 : i32, i32
  }
  func.func @transform_4(%arg0: i32, %arg1: i32) -> (i32, i32) {
    %c0_i32 = arith.constant 0 : i32
    %c0_i32_0 = arith.constant 0 : i32
    return %arg0, %c0_i32 : i32, i32
  }
  func.func @transform_5(%arg0: i32, %arg1: i32) -> (i32, i32) {
    %c0_i32 = arith.constant 0 : i32
    %c0_i32_0 = arith.constant 0 : i32
    return %arg0, %c0_i32 : i32, i32
  }
}

</mosaic_0001>

<llo_original>
// kernel: tpu_custom_call.1
$region0: #{tpu_custom_call.1}
  #allocation0 [shape = 'u32[]', space=smem, size = 0x4, offset = 0x4, fixed_abs, tag = 'smem constant byte address 0x4 - core index']
  #allocation1 [shape = 'u32[144,128]{1,0:T(1,128)}', space=vmem, size = 0x12000, scoped, tag = 'internal scratch']
  #allocation2 [shape = 'f32[128,32]{1,0:T(8,128)}', space=vmem, size = 0x10000, scoped, tag = 'scratch operand']
  %s0 = inlined_call_operand.vmem [shape: bf16[256,256], index: 0, kind: input, shape index: {}]
  %s1 = inlined_call_operand.vmem [shape: bf16[256,32], index: 1, kind: input, shape index: {}]
  %s2 = inlined_call_operand.vmem [shape: f32[32,128], index: 2, kind: input, shape index: {}]
  %s3 = inlined_call_operand.vmem [shape: f32[1,128], index: 3, kind: input, shape index: {}]
  %s4 = inlined_call_operand.vmem [shape: f32[256,1], index: 4, kind: input, shape index: {}]
  %s5 = inlined_call_operand.hbm [shape: bf16[256,128], index: 5, kind: output, shape index: {}]
  %s6 = sld [smem:[#allocation0]]
  $region102: #{tpu_custom_call.1} parent=0
    _
  %s8 = ssub.s32 1, %s6
  %s9 = scalar_select 0, %s8, %s6
  $region1: #{tpu_custom_call.1} parent=0
    #allocation3 [shape = 'u8[65536]{0}', space=vmem, size = 0x10000, scoped, tag = 'input window, operand 0']
    #allocation4 [shape = 'u8[65536]{0}', space=vmem, size = 0x10000, scoped, tag = 'output window, operand 0']
    #allocation5 [shape = 's32[2]{0}', space=sflag, size = 0x8, scoped, tag = 'scoped memory for tpu_custom_call.1']
    %10 = vsyncpa [#allocation5], 0
    %s11 = scalar_lea.sflag [#allocation5], 1
    %12 = vsyncpa %s11, 0
    loop: start=0, step=1, limit=6
    $region2: #{tpu_custom_call.1} parent=1 // loop_pre_header
      _
    $region3: #{tpu_custom_call.1} parent=1 // loop_header
      %s14 = sphi 0, %s18
      %p15 = scmp.ge.s32.totalorder %s14, 6
      %s21 = sphi 0, %s33
      %s22 = sphi 0, %s29
      %s23 = sphi 0, %s21
      %s24 = sphi 0, %s22
      %s25 = sphi 0, %s23
      %s26 = sphi 0, %s24
      %s38 = sphi 0, %s40
      %s41 = sphi 0, %s38
      %s42 = sphi 0, %s41
      %s58 = sphi 0, %s42
      %s64 = sphi 0, %s66
      %s67 = sphi 0, %s64
      %s68 = sphi 0, %s67
      %s84 = sphi 0, %s68
      %s88 = sphi 0, %s88
      %s90 = sphi 0, %s88
      %s91 = sphi 0, %s90
      %s105 = sphi 0, %s91
      %s109 = sphi 0, %s109
      %s111 = sphi 0, %s109
      %s112 = sphi 0, %s111
      %s126 = sphi 0, %s112
      %s132 = sphi 0, %s134
      %s135 = sphi 0, %s132
      %s136 = sphi 0, %s135
      %s152 = sphi 0, %s136
      %s158 = sphi 0, %s160
      %s161 = sphi 0, %s158
      %s162 = sphi 0, %s161
      %s178 = sphi 0, %s162
    $region4: #{tpu_custom_call.1} parent=1 // loop_header_branch
      %17 = sbr.rel (%p15) target = $region8
    $region5: #{tpu_custom_call.1} parent=1 // loop_body
      %s19 = ssub.s32 %s14, 1
      %s20 = ssub.s32 %s14, 2
      %s27 = sadd.s32 1, %s22
      %p28 = scmp.ge.s32.totalorder %s27, 2
      %s29 = scalar_select %p28, 0, %s27
      %s30 = sadd.s32 1, %s21
      %s31 = scalar_select %p28, %s30, %s21
      %p32 = scmp.ge.s32.totalorder %s31, 2
      %s33 = scalar_select %p32, 0, %s31
      %s34 = ssub.s32 %s21, %s33
      %s35 = ssub.s32 %s22, %s29
      %s36 = sor.u32 %s34, %s35
      %p37 = scmp.eq.s32.totalorder %s36, 0
      %s39 = sadd.s32 %s38, 1
      %s40 = scalar_select %p37, %s38, %s39
      %p43 = pneg %p37
      %p44 = scmp.eq.s32.totalorder %s14, 3
      %p45 = por %p43, %p44
      %p46 = scmp.ne.s32.totalorder %s38, %s41
      %p47 = scmp.eq.s32.totalorder %s14, 0
      %p48 = por %p46, %p47
      %p49 = scmp.ne.s32.totalorder %s38, %s41
      %p50 = scmp.eq.s32.totalorder %s19, 3
      %p51 = por %p49, %p50
      %p52 = scmp.ne.s32.totalorder %s41, %s42
      %p53 = scmp.eq.s32.totalorder %s19, 0
      %p54 = por %p52, %p53
      %p55 = scmp.ne.s32.totalorder %s41, %s42
      %p56 = scmp.eq.s32.totalorder %s20, 3
      %p57 = por %p55, %p56
      %p59 = scmp.ne.s32.totalorder %s42, %s58
      %p60 = scmp.eq.s32.totalorder %s20, 0
      %p61 = por %p59, %p60
      %s62 = ssub.s32 %s22, %s29
      %p63 = scmp.eq.s32.totalorder %s62, 0
      %s65 = sadd.s32 %s64, 1
      %s66 = scalar_select %p63, %s64, %s65
      %p69 = pneg %p63
      %p70 = scmp.eq.s32.totalorder %s14, 3
      %p71 = por %p69, %p70
      %p72 = scmp.ne.s32.totalorder %s64, %s67
      %p73 = scmp.eq.s32.totalorder %s14, 0
      %p74 = por %p72, %p73
      %p75 = scmp.ne.s32.totalorder %s64, %s67
      %p76 = scmp.eq.s32.totalorder %s19, 3
      %p77 = por %p75, %p76
      %p78 = scmp.ne.s32.totalorder %s67, %s68
      %p79 = scmp.eq.s32.totalorder %s19, 0
      %p80 = por %p78, %p79
      %p81 = scmp.ne.s32.totalorder %s67, %s68
      %p82 = scmp.eq.s32.totalorder %s20, 3
      %p83 = por %p81, %p82
      %p85 = scmp.ne.s32.totalorder %s68, %s84
      %p86 = scmp.eq.s32.totalorder %s20, 0
      %p87 = por %p85, %p86
      %s89 = sadd.s32 %s88, 1
      %p92 = scmp.eq.s32.totalorder %s14, 3
      %p93 = scmp.ne.s32.totalorder %s88, %s90
      %p94 = scmp.eq.s32.totalorder %s14, 0
      %p95 = por %p93, %p94
      %p96 = scmp.ne.s32.totalorder %s88, %s90
      %p97 = scmp.eq.s32.totalorder %s19, 3
      %p98 = por %p96, %p97
      %p99 = scmp.ne.s32.totalorder %s90, %s91
      %p100 = scmp.eq.s32.totalorder %s19, 0
      %p101 = por %p99, %p100
      %p102 = scmp.ne.s32.totalorder %s90, %s91
      %p103 = scmp.eq.s32.totalorder %s20, 3
      %p104 = por %p102, %p103
      %p106 = scmp.ne.s32.totalorder %s91, %s105
      %p107 = scmp.eq.s32.totalorder %s20, 0
      %p108 = por %p106, %p107
      %s110 = sadd.s32 %s109, 1
      %p113 = scmp.eq.s32.totalorder %s14, 3
      %p114 = scmp.ne.s32.totalorder %s109, %s111
      %p115 = scmp.eq.s32.totalorder %s14, 0
      %p116 = por %p114, %p115
      %p117 = scmp.ne.s32.totalorder %s109, %s111
      %p118 = scmp.eq.s32.totalorder %s19, 3
      %p119 = por %p117, %p118
      %p120 = scmp.ne.s32.totalorder %s111, %s112
      %p121 = scmp.eq.s32.totalorder %s19, 0
      %p122 = por %p120, %p121
      %p123 = scmp.ne.s32.totalorder %s111, %s112
      %p124 = scmp.eq.s32.totalorder %s20, 3
      %p125 = por %p123, %p124
      %p127 = scmp.ne.s32.totalorder %s112, %s126
      %p128 = scmp.eq.s32.totalorder %s20, 0
      %p129 = por %p127, %p128
      %s130 = ssub.s32 %s21, %s33
      %p131 = scmp.eq.s32.totalorder %s130, 0
      %s133 = sadd.s32 %s132, 1
      %s134 = scalar_select %p131, %s132, %s133
      %p137 = pneg %p131
      %p138 = scmp.eq.s32.totalorder %s14, 3
      %p139 = por %p137, %p138
      %p140 = scmp.ne.s32.totalorder %s132, %s135
      %p141 = scmp.eq.s32.totalorder %s14, 0
      %p142 = por %p140, %p141
      %p143 = scmp.ne.s32.totalorder %s132, %s135
      %p144 = scmp.eq.s32.totalorder %s19, 3
      %p145 = por %p143, %p144
      %p146 = scmp.ne.s32.totalorder %s135, %s136
      %p147 = scmp.eq.s32.totalorder %s19, 0
      %p148 = por %p146, %p147
      %p149 = scmp.ne.s32.totalorder %s135, %s136
      %p150 = scmp.eq.s32.totalorder %s20, 3
      %p151 = por %p149, %p150
      %p153 = scmp.ne.s32.totalorder %s136, %s152
      %p154 = scmp.eq.s32.totalorder %s20, 0
      %p155 = por %p153, %p154
      %s156 = ssub.s32 %s21, %s33
      %p157 = scmp.eq.s32.totalorder %s156, 0
      %s159 = sadd.s32 %s158, 1
      %s160 = scalar_select %p157, %s158, %s159
      %p163 = pneg %p157
      %p164 = scmp.eq.s32.totalorder %s14, 3
      %p165 = por %p163, %p164
      %p166 = scmp.ne.s32.totalorder %s158, %s161
      %p167 = scmp.eq.s32.totalorder %s14, 0
      %p168 = por %p166, %p167
      %p169 = scmp.ne.s32.totalorder %s158, %s161
      %p170 = scmp.eq.s32.totalorder %s19, 3
      %p171 = por %p169, %p170
      %p172 = scmp.ne.s32.totalorder %s161, %s162
      %p173 = scmp.eq.s32.totalorder %s19, 0
      %p174 = por %p172, %p173
      %p175 = scmp.ne.s32.totalorder %s161, %s162
      %p176 = scmp.eq.s32.totalorder %s20, 3
      %p177 = por %p175, %p176
      %p179 = scmp.ne.s32.totalorder %s162, %s178
      %p180 = scmp.eq.s32.totalorder %s20, 0
      %p181 = por %p179, %p180
      %p182 = scmp.le.s32.totalorder 1, %s14
      %p183 = scmp.lt.s32.totalorder %s14, 5
      %p184 = pnand %p182, %p183
      %p185 = pneg %p184
      // Predicated region
      $region9: #{tpu_custom_call.1} parent=5 // pred_check
        _
      $region10: #{tpu_custom_call.1} parent=5 // pred_check_branch
        %187 = sbr.rel (%p184) target = $region12
      $region11: #{tpu_custom_call.1} parent=5 // pred_region
        %s188 = ssub.s32 %s14, 1
        // Predicated region
        $region13: #{tpu_custom_call.1} parent=11 // pred_check
          %p189 = pneg %p101
        $region14: #{tpu_custom_call.1} parent=11 // pred_check_branch
          %191 = sbr.rel (%p189) target = $region16
        $region15: #{tpu_custom_call.1} parent=11 // pred_region
          _
        $region16: #{tpu_custom_call.1} parent=11 // pred_fallthru
          _
        // Predicated region
        $region17: #{tpu_custom_call.1} parent=11 // pred_check
          %p192 = pneg %p122
        $region18: #{tpu_custom_call.1} parent=11 // pred_check_branch
          %194 = sbr.rel (%p192) target = $region20
        $region19: #{tpu_custom_call.1} parent=11 // pred_region
          _
        $region20: #{tpu_custom_call.1} parent=11 // pred_fallthru
          _
      $region12: #{tpu_custom_call.1} parent=5 // pred_fallthru
        _
      %p195 = scmp.lt.s32.totalorder %s14, 4
      // Predicated region
      $region21: #{tpu_custom_call.1} parent=5 // pred_check
        %p196 = pneg %p195
      $region22: #{tpu_custom_call.1} parent=5 // pred_check_branch
        %198 = sbr.rel (%p196) target = $region24
      $region23: #{tpu_custom_call.1} parent=5 // pred_region
        // Predicated region
        $region25: #{tpu_custom_call.1} parent=23 // pred_check
          %p199 = pneg %p48
        $region26: #{tpu_custom_call.1} parent=23 // pred_check_branch
          %201 = sbr.rel (%p199) target = $region28
        $region27: #{tpu_custom_call.1} parent=23 // pred_region
          %s202 = sand.u32 %s38, 1
          %s203 = sand.u32 %s38, 1
          %s204 = smul.addr %s203, 64
          %s205 = scalar_lea.vmem [#allocation3], %s204
          %s206 = smul.u32 16, %s21
          %s207 = smul.addr %s206, 2
          %s208 = sadd.s32 %s22, %s207
          %s209 = smul.addr %s208, 4
          %s210 = scalar_lea.vmem %s0, %s209
          // Predicated region
          $region29: #{tpu_custom_call.1} parent=27 // pred_check
            _
          $region30: #{tpu_custom_call.1} parent=27 // pred_check_branch
            %212 = sbr.rel (0) target = $region32
          $region31: #{tpu_custom_call.1} parent=27 // pred_region
            // Predicated region
            $region33: #{tpu_custom_call.1} parent=31 // pred_check
              _
            $region34: #{tpu_custom_call.1} parent=31 // pred_check_branch
              %214 = sbr.rel target = $region36
            $region35: #{tpu_custom_call.1} parent=31 // pred_region
              // Predicated region
              $region48: #{tpu_custom_call.1} parent=35 // pred_check
                _
              $region49: #{tpu_custom_call.1} parent=35 // pred_check_branch
                %259 = sbr.rel (0) target = $region51
              $region50: #{tpu_custom_call.1} parent=35 // pred_region
                loop: start=0, step=1, limit=1
                $region52: #{tpu_custom_call.1} parent=50 // loop_pre_header
                  _
                $region53: #{tpu_custom_call.1} parent=50 // loop_header
                  %s261 = sphi 0, %s265
                  %p262 = scmp.ge.s32.totalorder %s261, 1
                  %s266 = sphi %s210, %s210
                  %s267 = sphi %s205, %s205
                $region54: #{tpu_custom_call.1} parent=50 // loop_header_branch
                  %264 = sbr.rel (%p262) target = $region58
                $region55: #{tpu_custom_call.1} parent=50 // loop_body
                  _
                $region56: #{tpu_custom_call.1} parent=50 // loop_footer
                  %s265 = sadd.s32 1, %s261
                $region57: #{tpu_custom_call.1} parent=50 // loop_footer_branch
                  %260 = sbr.rel target = $region53
                $region58: #{tpu_custom_call.1} parent=50 // loop_exit
                  _
                loop: start=0, step=1, limit=1
                $region59: #{tpu_custom_call.1} parent=50 // loop_pre_header
                  _
                $region60: #{tpu_custom_call.1} parent=50 // loop_header
                  %s270 = sphi 0, %s274
                  %p271 = scmp.ge.s32.totalorder %s270, 1
                  %s275 = sphi %s210, %s210
                  %s276 = sphi %s205, %s205
                $region61: #{tpu_custom_call.1} parent=50 // loop_header_branch
                  %273 = sbr.rel (%p271) target = $region65
                $region62: #{tpu_custom_call.1} parent=50 // loop_body
                  %v277 = vld [vmem:[%s275] sm:$0xf]
                  %278 = vst [vmem:[%s276] sm:$0xf] %v277
                  %v279 = vld [vmem:[%s275 + $0x8] sm:$0xf]
                  %280 = vst [vmem:[%s276 + $0x4] sm:$0xf] %v279
                  %v281 = vld [vmem:[%s275 + $0x10] sm:$0xf]
                  %282 = vst [vmem:[%s276 + $0x8] sm:$0xf] %v281
                  %v283 = vld [vmem:[%s275 + $0x18] sm:$0xf]
                  %284 = vst [vmem:[%s276 + $0xc] sm:$0xf] %v283
                  %v285 = vld [vmem:[%s275 + $0x20] sm:$0xf]
                  %286 = vst [vmem:[%s276 + $0x10] sm:$0xf] %v285
                  %v287 = vld [vmem:[%s275 + $0x28] sm:$0xf]
                  %288 = vst [vmem:[%s276 + $0x14] sm:$0xf] %v287
                  %v289 = vld [vmem:[%s275 + $0x30] sm:$0xf]
                  %290 = vst [vmem:[%s276 + $0x18] sm:$0xf] %v289
                  %v291 = vld [vmem:[%s275 + $0x38] sm:$0xf]
                  %292 = vst [vmem:[%s276 + $0x1c] sm:$0xf] %v291
                  %v293 = vld [vmem:[%s275 + $0x40] sm:$0xf]
                  %294 = vst [vmem:[%s276 + $0x20] sm:$0xf] %v293
                  %v295 = vld [vmem:[%s275 + $0x48] sm:$0xf]
                  %296 = vst [vmem:[%s276 + $0x24] sm:$0xf] %v295
                  %v297 = vld [vmem:[%s275 + $0x50] sm:$0xf]
                  %298 = vst [vmem:[%s276 + $0x28] sm:$0xf] %v297
                  %v299 = vld [vmem:[%s275 + $0x58] sm:$0xf]
                  %300 = vst [vmem:[%s276 + $0x2c] sm:$0xf] %v299
                  %v301 = vld [vmem:[%s275 + $0x60] sm:$0xf]
                  %302 = vst [vmem:[%s276 + $0x30] sm:$0xf] %v301
                  %v303 = vld [vmem:[%s275 + $0x68] sm:$0xf]
                  %304 = vst [vmem:[%s276 + $0x34] sm:$0xf] %v303
                  %v305 = vld [vmem:[%s275 + $0x70] sm:$0xf]
                  %306 = vst [vmem:[%s276 + $0x38] sm:$0xf] %v305
                  %v307 = vld [vmem:[%s275 + $0x78] sm:$0xf]
                  %308 = vst [vmem:[%s276 + $0x3c] sm:$0xf] %v307
                $region63: #{tpu_custom_call.1} parent=50 // loop_footer
                  %s274 = sadd.s32 1, %s270
                $region64: #{tpu_custom_call.1} parent=50 // loop_footer_branch
                  %269 = sbr.rel target = $region60
                $region65: #{tpu_custom_call.1} parent=50 // loop_exit
                  _
              $region51: #{tpu_custom_call.1} parent=35 // pred_fallthru
                _
            $region36: #{tpu_custom_call.1} parent=31 // pred_fallthru
              _
            // Predicated region
            $region37: #{tpu_custom_call.1} parent=31 // pred_check
              _
            $region38: #{tpu_custom_call.1} parent=31 // pred_check_branch
              %216 = sbr.rel (0) target = $region40
            $region39: #{tpu_custom_call.1} parent=31 // pred_region
              loop: start=0, step=1, limit=1
              $region41: #{tpu_custom_call.1} parent=39 // loop_pre_header
                _
              $region42: #{tpu_custom_call.1} parent=39 // loop_header
                %s219 = sphi 0, %s223
                %p220 = scmp.ge.s32.totalorder %s219, 1
                %s224 = sphi %s210, %s210
                %s225 = sphi %s205, %s205
              $region43: #{tpu_custom_call.1} parent=39 // loop_header_branch
                %222 = sbr.rel (%p220) target = $region47
              $region44: #{tpu_custom_call.1} parent=39 // loop_body
                %v226 = vld [vmem:[%s224] sm:$0xf]
                %227 = vst [vmem:[%s225] sm:$0xf] %v226
                %v228 = vld [vmem:[%s224 + $0x8] sm:$0xf]
                %229 = vst [vmem:[%s225 + $0x4] sm:$0xf] %v228
                %v230 = vld [vmem:[%s224 + $0x10] sm:$0xf]
                %231 = vst [vmem:[%s225 + $0x8] sm:$0xf] %v230
                %v232 = vld [vmem:[%s224 + $0x18] sm:$0xf]
                %233 = vst [vmem:[%s225 + $0xc] sm:$0xf] %v232
                %v234 = vld [vmem:[%s224 + $0x20] sm:$0xf]
                %235 = vst [vmem:[%s225 + $0x10] sm:$0xf] %v234
                %v236 = vld [vmem:[%s224 + $0x28] sm:$0xf]
                %237 = vst [vmem:[%s225 + $0x14] sm:$0xf] %v236
                %v238 = vld [vmem:[%s224 + $0x30] sm:$0xf]
                %239 = vst [vmem:[%s225 + $0x18] sm:$0xf] %v238
                %v240 = vld [vmem:[%s224 + $0x38] sm:$0xf]
                %241 = vst [vmem:[%s225 + $0x1c] sm:$0xf] %v240
                %v242 = vld [vmem:[%s224 + $0x40] sm:$0xf]
                %243 = vst [vmem:[%s225 + $0x20] sm:$0xf] %v242
                %v244 = vld [vmem:[%s224 + $0x48] sm:$0xf]
                %245 = vst [vmem:[%s225 + $0x24] sm:$0xf] %v244
                %v246 = vld [vmem:[%s224 + $0x50] sm:$0xf]
                %247 = vst [vmem:[%s225 + $0x28] sm:$0xf] %v246
                %v248 = vld [vmem:[%s224 + $0x58] sm:$0xf]
                %249 = vst [vmem:[%s225 + $0x2c] sm:$0xf] %v248
                %v250 = vld [vmem:[%s224 + $0x60] sm:$0xf]
                %251 = vst [vmem:[%s225 + $0x30] sm:$0xf] %v250
                %v252 = vld [vmem:[%s224 + $0x68] sm:$0xf]
                %253 = vst [vmem:[%s225 + $0x34] sm:$0xf] %v252
                %v254 = vld [vmem:[%s224 + $0x70] sm:$0xf]
                %255 = vst [vmem:[%s225 + $0x38] sm:$0xf] %v254
                %v256 = vld [vmem:[%s224 + $0x78] sm:$0xf]
                %257 = vst [vmem:[%s225 + $0x3c] sm:$0xf] %v256
              $region45: #{tpu_custom_call.1} parent=39 // loop_footer
                %s223 = sadd.s32 1, %s219
              $region46: #{tpu_custom_call.1} parent=39 // loop_footer_branch
                %218 = sbr.rel target = $region42
              $region47: #{tpu_custom_call.1} parent=39 // loop_exit
                _
            $region40: #{tpu_custom_call.1} parent=31 // pred_fallthru
              _
          $region32: #{tpu_custom_call.1} parent=27 // pred_fallthru
            _
          %309 = vnop
        $region28: #{tpu_custom_call.1} parent=23 // pred_fallthru
          _
        // Predicated region
        $region66: #{tpu_custom_call.1} parent=23 // pred_check
          %p310 = pneg %p74
        $region67: #{tpu_custom_call.1} parent=23 // pred_check_branch
          %312 = sbr.rel (%p310) target = $region69
        $region68: #{tpu_custom_call.1} parent=23 // pred_region
          %s313 = smul.u32 16, %s22
          %p314 = scmp.lt.s32.totalorder %s313, 31
          %s315 = scalar_select %p314, %s313, 31
          %s316 = smul.addr %s315, 4
          %s317 = scalar_lea.vmem %s1, %s316
          %s318 = smul.u32 16, %s22
        $region69: #{tpu_custom_call.1} parent=23 // pred_fallthru
          _
        // Predicated region
        $region70: #{tpu_custom_call.1} parent=23 // pred_check
          %p319 = pneg %p142
        $region71: #{tpu_custom_call.1} parent=23 // pred_check_branch
          %321 = sbr.rel (%p319) target = $region73
        $region72: #{tpu_custom_call.1} parent=23 // pred_region
          %s322 = smul.u32 16, %s21
          %p323 = scmp.lt.s32.totalorder %s322, 31
          %s324 = scalar_select %p323, %s322, 31
          %s325 = smul.addr %s324, 8
          %s326 = scalar_lea.vmem %s4, %s325
          %s327 = smul.u32 16, %s21
        $region73: #{tpu_custom_call.1} parent=23 // pred_fallthru
          _
      $region24: #{tpu_custom_call.1} parent=5 // pred_fallthru
        _
      %p328 = scmp.le.s32.totalorder 1, %s14
      %p329 = scmp.lt.s32.totalorder %s14, 5
      %p330 = pnand %p328, %p329
      %p331 = pneg %p330
      // Predicated region
      $region74: #{tpu_custom_call.1} parent=5 // pred_check
        _
      $region75: #{tpu_custom_call.1} parent=5 // pred_check_branch
        %333 = sbr.rel (%p330) target = $region77
      $region76: #{tpu_custom_call.1} parent=5 // pred_region
        %s334 = ssub.s32 %s14, 1
        %s335 = sand.u32 %s41, 1
        %s336 = sand.u32 %s41, 1
        %s337 = smul.addr %s336, 64
        %s338 = scalar_lea.vmem [#allocation3], %s337
        // Predicated region
        $region78: #{tpu_custom_call.1} parent=76 // pred_check
          %p339 = pneg %p54
        $region79: #{tpu_custom_call.1} parent=76 // pred_check_branch
          %341 = sbr.rel (%p339) target = $region81
        $region80: #{tpu_custom_call.1} parent=76 // pred_region
          _
        $region81: #{tpu_custom_call.1} parent=76 // pred_fallthru
          _
        %s342 = sand.u32 %s41, 1
        %s343 = sand.u32 %s41, 1
        %s344 = smul.addr %s343, 64
        %s345 = scalar_lea.vmem [#allocation3], %s344
        %p346 = pneg %p54
        %p347 = pneg %p51
        %s348 = smul.u32 16, %s24
        %p349 = scmp.lt.s32.totalorder %s348, 31
        %s350 = scalar_select %p349, %s348, 31
        %s351 = smul.addr %s350, 4
        %s352 = scalar_lea.vmem %s1, %s351
        %p353 = pneg %p80
        %p354 = pneg %p77
        %p355 = pneg %p101
        %p356 = pneg %p98
        %p357 = pneg %p122
        %p358 = pneg %p119
        %s359 = smul.u32 16, %s23
        %p360 = scmp.lt.s32.totalorder %s359, 31
        %s361 = scalar_select %p360, %s359, 31
        %s362 = smul.addr %s361, 8
        %s363 = scalar_lea.vmem %s4, %s362
        %p364 = pneg %p148
        %p365 = pneg %p145
        %p366 = pneg %p174
        %p367 = pneg %p171
        %s368 = sand.u32 %s161, 1
        %s369 = scalar_lea.sflag [#allocation5], %s368
        %s370 = sand.u32 %s161, 1
        %s371 = smul.addr %s370, 64
        %s372 = scalar_lea.vmem [#allocation4], %s371
        %s373 = smul.u32 16, %s23
        %s374 = smul.u32 16, %s24
        %p375 = scmp.lt.s32.totalorder %s374, 31
        %s376 = scalar_select %p375, %s374, 31
        %s377 = smul.addr %s376, 4
        %s378 = scalar_lea.vmem %s1, %s377
        %s379 = smul.u32 16, %s24
        %s380 = smul.u32 16, %s23
        %p381 = scmp.lt.s32.totalorder %s380, 31
        %s382 = scalar_select %p381, %s380, 31
        %s383 = smul.addr %s382, 8
        %s384 = scalar_lea.vmem %s4, %s383
        %s385 = smul.u32 16, %s23
        %s386 = smul.u32 16, %s23
        %p388 = scmp.eq.s32.totalorder %s24, 0
        // Predicated region
        $region82: #{tpu_custom_call.1} parent=76 // pred_check
          %p389 = pneg %p388
        $region83: #{tpu_custom_call.1} parent=76 // pred_check_branch
          %391 = sbr.rel (%p389) target = $region85
        $region84: #{tpu_custom_call.1} parent=76 // pred_region
          %vm392 = vcmask 261120
          %393 = vst.msk [vmem:[#allocation2] sm:$0xff] %vm392, 0.0
          %394 = vst.msk [vmem:[#allocation2 + $0x8] sm:$0xff] %vm392, 0.0
          %395 = vst.msk [vmem:[#allocation2 + $0x10] sm:$0xff] %vm392, 0.0
          %396 = vst.msk [vmem:[#allocation2 + $0x18] sm:$0xff] %vm392, 0.0
          %397 = vst.msk [vmem:[#allocation2 + $0x20] sm:$0xff] %vm392, 0.0
          %398 = vst.msk [vmem:[#allocation2 + $0x28] sm:$0xff] %vm392, 0.0
          %399 = vst.msk [vmem:[#allocation2 + $0x30] sm:$0xff] %vm392, 0.0
          %400 = vst.msk [vmem:[#allocation2 + $0x38] sm:$0xff] %vm392, 0.0
          %401 = vst.msk [vmem:[#allocation2 + $0x40] sm:$0xff] %vm392, 0.0
          %402 = vst.msk [vmem:[#allocation2 + $0x48] sm:$0xff] %vm392, 0.0
          %403 = vst.msk [vmem:[#allocation2 + $0x50] sm:$0xff] %vm392, 0.0
          %404 = vst.msk [vmem:[#allocation2 + $0x58] sm:$0xff] %vm392, 0.0
          %405 = vst.msk [vmem:[#allocation2 + $0x60] sm:$0xff] %vm392, 0.0
          %406 = vst.msk [vmem:[#allocation2 + $0x68] sm:$0xff] %vm392, 0.0
          %407 = vst.msk [vmem:[#allocation2 + $0x70] sm:$0xff] %vm392, 0.0
          %408 = vst.msk [vmem:[#allocation2 + $0x78] sm:$0xff] %vm392, 0.0
        $region85: #{tpu_custom_call.1} parent=76 // pred_fallthru
          _
        %v409 = vld [vmem:[#allocation2] sm:$0xff]
        %v410 = vld [vmem:[#allocation2 + $0x8] sm:$0xff]
        %v411 = vld [vmem:[#allocation2 + $0x10] sm:$0xff]
        %v412 = vld [vmem:[#allocation2 + $0x18] sm:$0xff]
        %v413 = vld [vmem:[#allocation2 + $0x20] sm:$0xff]
        %v414 = vld [vmem:[#allocation2 + $0x28] sm:$0xff]
        %v415 = vld [vmem:[#allocation2 + $0x30] sm:$0xff]
        %v416 = vld [vmem:[#allocation2 + $0x38] sm:$0xff]
        %v417 = vld [vmem:[#allocation2 + $0x40] sm:$0xff]
        %v418 = vld [vmem:[#allocation2 + $0x48] sm:$0xff]
        %v419 = vld [vmem:[#allocation2 + $0x50] sm:$0xff]
        %v420 = vld [vmem:[#allocation2 + $0x58] sm:$0xff]
        %v421 = vld [vmem:[#allocation2 + $0x60] sm:$0xff]
        %v422 = vld [vmem:[#allocation2 + $0x68] sm:$0xff]
        %v423 = vld [vmem:[#allocation2 + $0x70] sm:$0xff]
        %v424 = vld [vmem:[#allocation2 + $0x78] sm:$0xff]
        %v425 = vld [vmem:[%s338] sm:$0xf]
        %v426 = vld [vmem:[%s338 + $0x4] sm:$0xf]
        %v427 = vld [vmem:[%s338 + $0x8] sm:$0xf]
        %v428 = vld [vmem:[%s338 + $0xc] sm:$0xf]
        %v429 = vld [vmem:[%s338 + $0x10] sm:$0xf]
        %v430 = vld [vmem:[%s338 + $0x14] sm:$0xf]
        %v431 = vld [vmem:[%s338 + $0x18] sm:$0xf]
        %v432 = vld [vmem:[%s338 + $0x1c] sm:$0xf]
        %v433 = vld [vmem:[%s338 + $0x20] sm:$0xf]
        %v434 = vld [vmem:[%s338 + $0x24] sm:$0xf]
        %v435 = vld [vmem:[%s338 + $0x28] sm:$0xf]
        %v436 = vld [vmem:[%s338 + $0x2c] sm:$0xf]
        %v437 = vld [vmem:[%s338 + $0x30] sm:$0xf]
        %v438 = vld [vmem:[%s338 + $0x34] sm:$0xf]
        %v439 = vld [vmem:[%s338 + $0x38] sm:$0xf]
        %v440 = vld [vmem:[%s338 + $0x3c] sm:$0xf]
        %v441 = vld [vmem:[%s378] sm:$0xf]
        %v442 = vld [vmem:[%s378 + $0x4] sm:$0xf]
        %v443 = vld [vmem:[%s378 + $0x8] sm:$0xf]
        %v444 = vld [vmem:[%s378 + $0xc] sm:$0xf]
        %v445 = vld [vmem:[%s378 + $0x10] sm:$0xf]
        %v446 = vld [vmem:[%s378 + $0x14] sm:$0xf]
        %v447 = vld [vmem:[%s378 + $0x18] sm:$0xf]
        %v448 = vld [vmem:[%s378 + $0x1c] sm:$0xf]
        %v449 = vld [vmem:[%s378 + $0x20] sm:$0xf]
        %v450 = vld [vmem:[%s378 + $0x24] sm:$0xf]
        %v451 = vld [vmem:[%s378 + $0x28] sm:$0xf]
        %v452 = vld [vmem:[%s378 + $0x2c] sm:$0xf]
        %v453 = vld [vmem:[%s378 + $0x30] sm:$0xf]
        %v454 = vld [vmem:[%s378 + $0x34] sm:$0xf]
        %v455 = vld [vmem:[%s378 + $0x38] sm:$0xf]
        %v456 = vld [vmem:[%s378 + $0x3c] sm:$0xf]
        %v473 = vunpack.c.l.b16 %v425
        %v474 = vunpack.c.l.b16 %v426
        %v475 = vunpack.c.l.b16 %v427
        %v476 = vunpack.c.l.b16 %v428
        %v477 = vunpack.c.l.b16 %v429
        %v478 = vunpack.c.l.b16 %v430
        %v479 = vunpack.c.l.b16 %v431
        %v480 = vunpack.c.l.b16 %v432
        %v481 = vunpack.c.l.b16 %v433
        %v482 = vunpack.c.l.b16 %v434
        %v483 = vunpack.c.l.b16 %v435
        %v484 = vunpack.c.l.b16 %v436
        %v485 = vunpack.c.l.b16 %v437
        %v486 = vunpack.c.l.b16 %v438
        %v487 = vunpack.c.l.b16 %v439
        %v488 = vunpack.c.l.b16 %v440
        %v489 = vpack.c.b16 %v474, %v473
        %v490 = vpack.c.b16 %v476, %v475
        %v491 = vpack.c.b16 %v478, %v477
        %v492 = vpack.c.b16 %v480, %v479
        %v493 = vpack.c.b16 %v482, %v481
        %v494 = vpack.c.b16 %v484, %v483
        %v495 = vpack.c.b16 %v486, %v485
        %v496 = vpack.c.b16 %v488, %v487
        %v521 = vunpack.c.l.b16 %v441
        %v522 = vunpack.c.l.b16 %v442
        %v523 = vunpack.c.l.b16 %v443
        %v524 = vunpack.c.l.b16 %v444
        %v525 = vunpack.c.l.b16 %v445
        %v526 = vunpack.c.l.b16 %v446
        %v527 = vunpack.c.l.b16 %v447
        %v528 = vunpack.c.l.b16 %v448
        %v529 = vunpack.c.l.b16 %v449
        %v530 = vunpack.c.l.b16 %v450
        %v531 = vunpack.c.l.b16 %v451
        %v532 = vunpack.c.l.b16 %v452
        %v533 = vunpack.c.l.b16 %v453
        %v534 = vunpack.c.l.b16 %v454
        %v535 = vunpack.c.l.b16 %v455
        %v536 = vunpack.c.l.b16 %v456
        %v537 = vpack.c.b16 %v522, %v521
        %v538 = vpack.c.b16 %v524, %v523
        %v539 = vpack.c.b16 %v526, %v525
        %v540 = vpack.c.b16 %v528, %v527
        %v541 = vpack.c.b16 %v530, %v529
        %v542 = vpack.c.b16 %v532, %v531
        %v543 = vpack.c.b16 %v534, %v533
        %v544 = vpack.c.b16 %v536, %v535
        %553 = vmatprep.subr.bf16.mxu0 0
        %554 = vmatpush1.bf16.msra.mxu0 %v537
        %555 = vmatprep.subr.bf16.mxu0 0
        %556 = vmatpush1.bf16.msra.mxu0 %v538
        %557 = vmatprep.subr.bf16.mxu0 0
        %558 = vmatpush1.bf16.msra.mxu0 %v539
        %559 = vmatprep.subr.bf16.mxu0 0
        %560 = vmatpush1.bf16.msra.mxu0 %v540
        %561 = vmatprep.subr.bf16.mxu0 0
        %562 = vmatpush1.bf16.msra.mxu0 %v541
        %563 = vmatprep.subr.bf16.mxu0 0
        %564 = vmatpush1.bf16.msra.mxu0 %v542
        %565 = vmatprep.subr.bf16.mxu0 0
        %566 = vmatpush1.bf16.msra.mxu0 %v543
        %567 = vmatprep.subr.bf16.mxu0 0
        %568 = vmatpush1.bf16.msra.mxu0 %v544
        %569 = vmatprep.subr.bf16.mxu0 0
        %570 = vmatpush1.bf16.msra.mxu0 0
        %571 = vmatprep.subr.bf16.mxu0 0
        %572 = vmatpush1.bf16.msra.mxu0 0
        %573 = vmatprep.subr.bf16.mxu0 0
        %574 = vmatpush1.bf16.msra.mxu0 0
        %575 = vmatprep.subr.bf16.mxu0 0
        %576 = vmatpush1.bf16.msra.mxu0 0
        %577 = vmatprep.subr.bf16.mxu0 0
        %578 = vmatpush1.bf16.msra.mxu0 0
        %579 = vmatprep.subr.bf16.mxu0 0
        %580 = vmatpush1.bf16.msra.mxu0 0
        %581 = vmatprep.subr.bf16.mxu0 0
        %582 = vmatpush1.bf16.msra.mxu0 0
        %583 = vmatprep.subr.bf16.mxu0 0
        %584 = vmatpush1.bf16.msra.mxu0 0
        %585 = vmatprep.mubr.bf16.mxu0 0
        %586 = vmatmul.mubr.bf16.gmra.mrb[0].mxu0 %v489
        %v587 = vpop.f32.mrb[0].mxu0
        %v588 = vadd.f32 0.0, %v587
        %v589 = vpop.f32.mrb[0].mxu0
        %v590 = vpop.f32.mrb[0].mxu0
        %v591 = vadd.f32 0.0, %v590
        %v592 = vpop.f32.mrb[0].mxu0
        %593 = vmatprep.mubr.bf16.mxu0 0
        %594 = vmatmul.mubr.bf16.gmra.mrb[0].mxu0 %v490
        %v595 = vpop.f32.mrb[0].mxu0
        %v596 = vadd.f32 0.0, %v595
        %v597 = vpop.f32.mrb[0].mxu0
        %v598 = vpop.f32.mrb[0].mxu0
        %v599 = vadd.f32 0.0, %v598
        %v600 = vpop.f32.mrb[0].mxu0
        %601 = vmatprep.mubr.bf16.mxu0 0
        %602 = vmatmul.mubr.bf16.gmra.mrb[0].mxu0 %v491
        %v603 = vpop.f32.mrb[0].mxu0
        %v604 = vadd.f32 0.0, %v603
        %v605 = vpop.f32.mrb[0].mxu0
        %v606 = vpop.f32.mrb[0].mxu0
        %v607 = vadd.f32 0.0, %v606
        %v608 = vpop.f32.mrb[0].mxu0
        %609 = vmatprep.mubr.bf16.mxu0 0
        %610 = vmatmul.mubr.bf16.gmra.mrb[0].mxu0 %v492
        %v611 = vpop.f32.mrb[0].mxu0
        %v612 = vadd.f32 0.0, %v611
        %v613 = vpop.f32.mrb[0].mxu0
        %v614 = vpop.f32.mrb[0].mxu0
        %v615 = vadd.f32 0.0, %v614
        %v616 = vpop.f32.mrb[0].mxu0
        %617 = vmatprep.mubr.bf16.mxu0 0
        %618 = vmatmul.mubr.bf16.gmra.mrb[0].mxu0 %v493
        %v619 = vpop.f32.mrb[0].mxu0
        %v620 = vadd.f32 0.0, %v619
        %v621 = vpop.f32.mrb[0].mxu0
        %v622 = vpop.f32.mrb[0].mxu0
        %v623 = vadd.f32 0.0, %v622
        %v624 = vpop.f32.mrb[0].mxu0
        %625 = vmatprep.mubr.bf16.mxu0 0
        %626 = vmatmul.mubr.bf16.gmra.mrb[0].mxu0 %v494
        %v627 = vpop.f32.mrb[0].mxu0
        %v628 = vadd.f32 0.0, %v627
        %v629 = vpop.f32.mrb[0].mxu0
        %v630 = vpop.f32.mrb[0].mxu0
        %v631 = vadd.f32 0.0, %v630
        %v632 = vpop.f32.mrb[0].mxu0
        %633 = vmatprep.mubr.bf16.mxu0 0
        %634 = vmatmul.mubr.bf16.gmra.mrb[0].mxu0 %v495
        %v635 = vpop.f32.mrb[0].mxu0
        %v636 = vadd.f32 0.0, %v635
        %v637 = vpop.f32.mrb[0].mxu0
        %v638 = vpop.f32.mrb[0].mxu0
        %v639 = vadd.f32 0.0, %v638
        %v640 = vpop.f32.mrb[0].mxu0
        %641 = vmatprep.mubr.bf16.mxu0 0
        %642 = vmatmul.mubr.bf16.gmra.mrb[0].mxu0 %v496
        %v643 = vpop.f32.mrb[0].mxu0
        %v644 = vadd.f32 0.0, %v643
        %v645 = vpop.f32.mrb[0].mxu0
        %v646 = vpop.f32.mrb[0].mxu0
        %v647 = vadd.f32 0.0, %v646
        %v648 = vpop.f32.mrb[0].mxu0
        %649 = vdwg.mxu0
        %v650 = vadd.f32 %v409, %v588
        %v651 = vadd.f32 %v410, %v591
        %v652 = vadd.f32 %v411, %v596
        %v653 = vadd.f32 %v412, %v599
        %v654 = vadd.f32 %v413, %v604
        %v655 = vadd.f32 %v414, %v607
        %v656 = vadd.f32 %v415, %v612
        %v657 = vadd.f32 %v416, %v615
        %v658 = vadd.f32 %v417, %v620
        %v659 = vadd.f32 %v418, %v623
        %v660 = vadd.f32 %v419, %v628
        %v661 = vadd.f32 %v420, %v631
        %v662 = vadd.f32 %v421, %v636
        %v663 = vadd.f32 %v422, %v639
        %v664 = vadd.f32 %v423, %v644
        %v665 = vadd.f32 %v424, %v647
        %vm666 = vcmask 261120
        %667 = vst.msk [vmem:[#allocation2] sm:$0xff] %vm666, %v650
        %668 = vst.msk [vmem:[#allocation2 + $0x8] sm:$0xff] %vm666, %v651
        %669 = vst.msk [vmem:[#allocation2 + $0x10] sm:$0xff] %vm666, %v652
        %670 = vst.msk [vmem:[#allocation2 + $0x18] sm:$0xff] %vm666, %v653
        %671 = vst.msk [vmem:[#allocation2 + $0x20] sm:$0xff] %vm666, %v654
        %672 = vst.msk [vmem:[#allocation2 + $0x28] sm:$0xff] %vm666, %v655
        %673 = vst.msk [vmem:[#allocation2 + $0x30] sm:$0xff] %vm666, %v656
        %674 = vst.msk [vmem:[#allocation2 + $0x38] sm:$0xff] %vm666, %v657
        %675 = vst.msk [vmem:[#allocation2 + $0x40] sm:$0xff] %vm666, %v658
        %676 = vst.msk [vmem:[#allocation2 + $0x48] sm:$0xff] %vm666, %v659
        %677 = vst.msk [vmem:[#allocation2 + $0x50] sm:$0xff] %vm666, %v660
        %678 = vst.msk [vmem:[#allocation2 + $0x58] sm:$0xff] %vm666, %v661
        %679 = vst.msk [vmem:[#allocation2 + $0x60] sm:$0xff] %vm666, %v662
        %680 = vst.msk [vmem:[#allocation2 + $0x68] sm:$0xff] %vm666, %v663
        %681 = vst.msk [vmem:[#allocation2 + $0x70] sm:$0xff] %vm666, %v664
        %682 = vst.msk [vmem:[#allocation2 + $0x78] sm:$0xff] %vm666, %v665
        %p683 = scmp.eq.s32.totalorder %s24, 1
        // Predicated region
        $region86: #{tpu_custom_call.1} parent=76 // pred_check
          %p684 = pneg %p683
        $region87: #{tpu_custom_call.1} parent=76 // pred_check_branch
          %686 = sbr.rel (%p684) target = $region89
        $region88: #{tpu_custom_call.1} parent=76 // pred_region
          %v687 = vld [vmem:[%s384] sm:$0xff]
          %v688 = vld [vmem:[%s384 + $0x8] sm:$0xff]
          %v689 = vld [vmem:[%s384 + $0x10] sm:$0xff]
          %v690 = vld [vmem:[%s384 + $0x18] sm:$0xff]
          %v691 = vld [vmem:[%s384 + $0x20] sm:$0xff]
          %v692 = vld [vmem:[%s384 + $0x28] sm:$0xff]
          %v693 = vld [vmem:[%s384 + $0x30] sm:$0xff]
          %v694 = vld [vmem:[%s384 + $0x38] sm:$0xff]
          %v695 = vld [vmem:[%s384 + $0x40] sm:$0xff]
          %v696 = vld [vmem:[%s384 + $0x48] sm:$0xff]
          %v697 = vld [vmem:[%s384 + $0x50] sm:$0xff]
          %v698 = vld [vmem:[%s384 + $0x58] sm:$0xff]
          %v699 = vld [vmem:[%s384 + $0x60] sm:$0xff]
          %v700 = vld [vmem:[%s384 + $0x68] sm:$0xff]
          %v701 = vld [vmem:[%s384 + $0x70] sm:$0xff]
          %v702 = vld [vmem:[%s384 + $0x78] sm:$0xff]
          %v703 = vld [vmem:[#allocation2] sm:$0xff]
          %v704 = vld [vmem:[#allocation2 + $0x8] sm:$0xff]
          %v705 = vld [vmem:[#allocation2 + $0x10] sm:$0xff]
          %v706 = vld [vmem:[#allocation2 + $0x18] sm:$0xff]
          %v707 = vld [vmem:[#allocation2 + $0x20] sm:$0xff]
          %v708 = vld [vmem:[#allocation2 + $0x28] sm:$0xff]
          %v709 = vld [vmem:[#allocation2 + $0x30] sm:$0xff]
          %v710 = vld [vmem:[#allocation2 + $0x38] sm:$0xff]
          %v711 = vld [vmem:[#allocation2 + $0x40] sm:$0xff]
          %v712 = vld [vmem:[#allocation2 + $0x48] sm:$0xff]
          %v713 = vld [vmem:[#allocation2 + $0x50] sm:$0xff]
          %v714 = vld [vmem:[#allocation2 + $0x58] sm:$0xff]
          %v715 = vld [vmem:[#allocation2 + $0x60] sm:$0xff]
          %v716 = vld [vmem:[#allocation2 + $0x68] sm:$0xff]
          %v717 = vld [vmem:[#allocation2 + $0x70] sm:$0xff]
          %v718 = vld [vmem:[#allocation2 + $0x78] sm:$0xff]
          %v719 = vld [vmem:[%s2] sm:$0xff]
          %v720 = vld [vmem:[%s2 + $0x8] sm:$0xff]
          %v721 = vld [vmem:[%s2 + $0x10] sm:$0xff]
          %v722 = vld [vmem:[%s2 + $0x18] sm:$0xff]
          %v724 = vsel %vm666, %v703, 0
          %v727 = vsel %vm666, %v704, 0
          %v730 = vsel %vm666, %v705, 0
          %v733 = vsel %vm666, %v706, 0
          %v736 = vsel %vm666, %v707, 0
          %v739 = vsel %vm666, %v708, 0
          %v742 = vsel %vm666, %v709, 0
          %v745 = vsel %vm666, %v710, 0
          %v748 = vsel %vm666, %v711, 0
          %v751 = vsel %vm666, %v712, 0
          %v754 = vsel %vm666, %v713, 0
          %v757 = vsel %vm666, %v714, 0
          %v760 = vsel %vm666, %v715, 0
          %v763 = vsel %vm666, %v716, 0
          %v766 = vsel %vm666, %v717, 0
          %v769 = vsel %vm666, %v718, 0
          %771 = vmatprep.subr.mxu0 0.0
          %772 = vmatpush1.msra.mxu0 %v719
          %773 = vmatprep.subr.mxu0 0.0
          %774 = vmatpush1.msra.mxu0 %v720
          %775 = vmatprep.subr.mxu0 0.0
          %776 = vmatpush1.msra.mxu0 %v721
          %777 = vmatprep.subr.mxu0 0.0
          %778 = vmatpush1.msra.mxu0 %v722
          %779 = vmatprep.subr.mxu0 0.0
          %780 = vmatpush1.msra.mxu0 0.0
          %781 = vmatprep.subr.mxu0 0.0
          %782 = vmatpush1.msra.mxu0 0.0
          %783 = vmatprep.subr.mxu0 0.0
          %784 = vmatpush1.msra.mxu0 0.0
          %785 = vmatprep.subr.mxu0 0.0
          %786 = vmatpush1.msra.mxu0 0.0
          %787 = vmatprep.subr.mxu0 0.0
          %788 = vmatpush1.msra.mxu0 0.0
          %789 = vmatprep.subr.mxu0 0.0
          %790 = vmatpush1.msra.mxu0 0.0
          %791 = vmatprep.subr.mxu0 0.0
          %792 = vmatpush1.msra.mxu0 0.0
          %793 = vmatprep.subr.mxu0 0.0
          %794 = vmatpush1.msra.mxu0 0.0
          %795 = vmatprep.subr.mxu0 0.0
          %796 = vmatpush1.msra.mxu0 0.0
          %797 = vmatprep.subr.mxu0 0.0
          %798 = vmatpush1.msra.mxu0 0.0
          %799 = vmatprep.subr.mxu0 0.0
          %800 = vmatpush1.msra.mxu0 0.0
          %801 = vmatprep.subr.mxu0 0.0
          %802 = vmatpush1.msra.mxu0 0.0
          %803 = vmatprep.subr.mxu0 0.0
          %804 = vmatpush1.msra.mxu0 0.0
          %805 = vmatprep.subr.mxu0 0.0
          %806 = vmatpush1.msra.mxu0 0.0
          %807 = vmatprep.subr.mxu0 0.0
          %808 = vmatpush1.msra.mxu0 0.0
          %809 = vmatprep.subr.mxu0 0.0
          %810 = vmatpush1.msra.mxu0 0.0
          %811 = vmatprep.subr.mxu0 0.0
          %812 = vmatpush1.msra.mxu0 0.0
          %813 = vmatprep.subr.mxu0 0.0
          %814 = vmatpush1.msra.mxu0 0.0
          %815 = vmatprep.subr.mxu0 0.0
          %816 = vmatpush1.msra.mxu0 0.0
          %817 = vmatprep.subr.mxu0 0.0
          %818 = vmatpush1.msra.mxu0 0.0
          %819 = vmatprep.subr.mxu0 0.0
          %820 = vmatpush1.msra.mxu0 0.0
          %821 = vmatprep.subr.mxu0 0.0
          %822 = vmatpush1.msra.mxu0 0.0
          %823 = vmatprep.subr.mxu0 0.0
          %824 = vmatpush1.msra.mxu0 0.0
          %825 = vmatprep.subr.mxu0 0.0
          %826 = vmatpush1.msra.mxu0 0.0
          %827 = vmatprep.subr.mxu0 0.0
          %828 = vmatpush1.msra.mxu0 0.0
          %829 = vmatprep.subr.mxu0 0.0
          %830 = vmatpush1.msra.mxu0 0.0
          %831 = vmatprep.subr.mxu0 0.0
          %832 = vmatpush1.msra.mxu0 0.0
          %833 = vmatprep.subr.mxu0 0.0
          %834 = vmatpush1.msra.mxu0 0.0
          %835 = vmatprep.mubr.f32.mxu0 0.0
          %836 = vmatmul.mubr.f32.gmra.mrb[0].mxu0 %v724
          %v837 = vpop.f32.mrb[0].mxu0
          %v838 = vadd.f32 0.0, %v837
          %v839 = vpop.f32.mrb[0].mxu0
          %840 = vmatprep.mubr.f32.mxu0 0.0
          %841 = vmatmul.mubr.f32.gmra.mrb[0].mxu0 %v727
          %v842 = vpop.f32.mrb[0].mxu0
          %v843 = vadd.f32 0.0, %v842
          %v844 = vpop.f32.mrb[0].mxu0
          %845 = vmatprep.mubr.f32.mxu0 0.0
          %846 = vmatmul.mubr.f32.gmra.mrb[0].mxu0 %v730
          %v847 = vpop.f32.mrb[0].mxu0
          %v848 = vadd.f32 0.0, %v847
          %v849 = vpop.f32.mrb[0].mxu0
          %850 = vmatprep.mubr.f32.mxu0 0.0
          %851 = vmatmul.mubr.f32.gmra.mrb[0].mxu0 %v733
          %v852 = vpop.f32.mrb[0].mxu0
          %v853 = vadd.f32 0.0, %v852
          %v854 = vpop.f32.mrb[0].mxu0
          %855 = vmatprep.mubr.f32.mxu0 0.0
          %856 = vmatmul.mubr.f32.gmra.mrb[0].mxu0 %v736
          %v857 = vpop.f32.mrb[0].mxu0
          %v858 = vadd.f32 0.0, %v857
          %v859 = vpop.f32.mrb[0].mxu0
          %860 = vmatprep.mubr.f32.mxu0 0.0
          %861 = vmatmul.mubr.f32.gmra.mrb[0].mxu0 %v739
          %v862 = vpop.f32.mrb[0].mxu0
          %v863 = vadd.f32 0.0, %v862
          %v864 = vpop.f32.mrb[0].mxu0
          %865 = vmatprep.mubr.f32.mxu0 0.0
          %866 = vmatmul.mubr.f32.gmra.mrb[0].mxu0 %v742
          %v867 = vpop.f32.mrb[0].mxu0
          %v868 = vadd.f32 0.0, %v867
          %v869 = vpop.f32.mrb[0].mxu0
          %870 = vmatprep.mubr.f32.mxu0 0.0
          %871 = vmatmul.mubr.f32.gmra.mrb[0].mxu0 %v745
          %v872 = vpop.f32.mrb[0].mxu0
          %v873 = vadd.f32 0.0, %v872
          %v874 = vpop.f32.mrb[0].mxu0
          %875 = vmatprep.mubr.f32.mxu0 0.0
          %876 = vmatmul.mubr.f32.gmra.mrb[0].mxu0 %v748
          %v877 = vpop.f32.mrb[0].mxu0
          %v878 = vadd.f32 0.0, %v877
          %v879 = vpop.f32.mrb[0].mxu0
          %880 = vmatprep.mubr.f32.mxu0 0.0
          %881 = vmatmul.mubr.f32.gmra.mrb[0].mxu0 %v751
          %v882 = vpop.f32.mrb[0].mxu0
          %v883 = vadd.f32 0.0, %v882
          %v884 = vpop.f32.mrb[0].mxu0
          %885 = vmatprep.mubr.f32.mxu0 0.0
          %886 = vmatmul.mubr.f32.gmra.mrb[0].mxu0 %v754
          %v887 = vpop.f32.mrb[0].mxu0
          %v888 = vadd.f32 0.0, %v887
          %v889 = vpop.f32.mrb[0].mxu0
          %890 = vmatprep.mubr.f32.mxu0 0.0
          %891 = vmatmul.mubr.f32.gmra.mrb[0].mxu0 %v757
          %v892 = vpop.f32.mrb[0].mxu0
          %v893 = vadd.f32 0.0, %v892
          %v894 = vpop.f32.mrb[0].mxu0
          %895 = vmatprep.mubr.f32.mxu0 0.0
          %896 = vmatmul.mubr.f32.gmra.mrb[0].mxu0 %v760
          %v897 = vpop.f32.mrb[0].mxu0
          %v898 = vadd.f32 0.0, %v897
          %v899 = vpop.f32.mrb[0].mxu0
          %900 = vmatprep.mubr.f32.mxu0 0.0
          %901 = vmatmul.mubr.f32.gmra.mrb[0].mxu0 %v763
          %v902 = vpop.f32.mrb[0].mxu0
          %v903 = vadd.f32 0.0, %v902
          %v904 = vpop.f32.mrb[0].mxu0
          %905 = vmatprep.mubr.f32.mxu0 0.0
          %906 = vmatmul.mubr.f32.gmra.mrb[0].mxu0 %v766
          %v907 = vpop.f32.mrb[0].mxu0
          %v908 = vadd.f32 0.0, %v907
          %v909 = vpop.f32.mrb[0].mxu0
          %910 = vmatprep.mubr.f32.mxu0 0.0
          %911 = vmatmul.mubr.f32.gmra.mrb[0].mxu0 %v769
          %v912 = vpop.f32.mrb[0].mxu0
          %v913 = vadd.f32 0.0, %v912
          %v914 = vpop.f32.mrb[0].mxu0
          %915 = vdwg.mxu0
          %vm916 = vcmp.gt.f32.partialorder %v687, 0.0
          %vm917 = vcmp.gt.f32.partialorder %v688, 0.0
          %vm918 = vcmp.gt.f32.partialorder %v689, 0.0
          %vm919 = vcmp.gt.f32.partialorder %v690, 0.0
          %vm920 = vcmp.gt.f32.partialorder %v691, 0.0
          %vm921 = vcmp.gt.f32.partialorder %v692, 0.0
          %vm922 = vcmp.gt.f32.partialorder %v693, 0.0
          %vm923 = vcmp.gt.f32.partialorder %v694, 0.0
          %vm924 = vcmp.gt.f32.partialorder %v695, 0.0
          %vm925 = vcmp.gt.f32.partialorder %v696, 0.0
          %vm926 = vcmp.gt.f32.partialorder %v697, 0.0
          %vm927 = vcmp.gt.f32.partialorder %v698, 0.0
          %vm928 = vcmp.gt.f32.partialorder %v699, 0.0
          %vm929 = vcmp.gt.f32.partialorder %v700, 0.0
          %vm930 = vcmp.gt.f32.partialorder %v701, 0.0
          %vm931 = vcmp.gt.f32.partialorder %v702, 0.0
          %v932 = vsel %vm916, 1, 0
          %v933 = vsel %vm917, 1, 0
          %v934 = vsel %vm918, 1, 0
          %v935 = vsel %vm919, 1, 0
          %v936 = vsel %vm920, 1, 0
          %v937 = vsel %vm921, 1, 0
          %v938 = vsel %vm922, 1, 0
          %v939 = vsel %vm923, 1, 0
          %v940 = vsel %vm924, 1, 0
          %v941 = vsel %vm925, 1, 0
          %v942 = vsel %vm926, 1, 0
          %v943 = vsel %vm927, 1, 0
          %v944 = vsel %vm928, 1, 0
          %v945 = vsel %vm929, 1, 0
          %v946 = vsel %vm930, 1, 0
          %v947 = vsel %vm931, 1, 0
          %v948 = vcvt.s32.f32 %v932
          %v949 = vcvt.s32.f32 %v933
          %v950 = vcvt.s32.f32 %v934
          %v951 = vcvt.s32.f32 %v935
          %v952 = vcvt.s32.f32 %v936
          %v953 = vcvt.s32.f32 %v937
          %v954 = vcvt.s32.f32 %v938
          %v955 = vcvt.s32.f32 %v939
          %v956 = vcvt.s32.f32 %v940
          %v957 = vcvt.s32.f32 %v941
          %v958 = vcvt.s32.f32 %v942
          %v959 = vcvt.s32.f32 %v943
          %v960 = vcvt.s32.f32 %v944
          %v961 = vcvt.s32.f32 %v945
          %v962 = vcvt.s32.f32 %v946
          %v963 = vcvt.s32.f32 %v947
          %965 = vset.pattern.permute.xlu0 0
          %966 = vperm.xlu0 %965, %v687
          %v967 = vpop.permute.xlu0 %966
          %970 = vset.pattern.permute.xlu0 0
          %971 = vperm.xlu0 %970, %v688
          %v972 = vpop.permute.xlu0 %971
          %975 = vset.pattern.permute.xlu0 0
          %976 = vperm.xlu0 %975, %v689
          %v977 = vpop.permute.xlu0 %976
          %980 = vset.pattern.permute.xlu0 0
          %981 = vperm.xlu0 %980, %v690
          %v982 = vpop.permute.xlu0 %981
          %985 = vset.pattern.permute.xlu0 0
          %986 = vperm.xlu0 %985, %v691
          %v987 = vpop.permute.xlu0 %986
          %990 = vset.pattern.permute.xlu0 0
          %991 = vperm.xlu0 %990, %v692
          %v992 = vpop.permute.xlu0 %991
          %995 = vset.pattern.permute.xlu0 0
          %996 = vperm.xlu0 %995, %v693
          %v997 = vpop.permute.xlu0 %996
          %1000 = vset.pattern.permute.xlu0 0
          %1001 = vperm.xlu0 %1000, %v694
          %v1002 = vpop.permute.xlu0 %1001
          %1005 = vset.pattern.permute.xlu0 0
          %1006 = vperm.xlu0 %1005, %v695
          %v1007 = vpop.permute.xlu0 %1006
          %1010 = vset.pattern.permute.xlu0 0
          %1011 = vperm.xlu0 %1010, %v696
          %v1012 = vpop.permute.xlu0 %1011
          %1015 = vset.pattern.permute.xlu0 0
          %1016 = vperm.xlu0 %1015, %v697
          %v1017 = vpop.permute.xlu0 %1016
          %1020 = vset.pattern.permute.xlu0 0
          %1021 = vperm.xlu0 %1020, %v698
          %v1022 = vpop.permute.xlu0 %1021
          %1025 = vset.pattern.permute.xlu0 0
          %1026 = vperm.xlu0 %1025, %v699
          %v1027 = vpop.permute.xlu0 %1026
          %1030 = vset.pattern.permute.xlu0 0
          %1031 = vperm.xlu0 %1030, %v700
          %v1032 = vpop.permute.xlu0 %1031
          %1035 = vset.pattern.permute.xlu0 0
          %1036 = vperm.xlu0 %1035, %v701
          %v1037 = vpop.permute.xlu0 %1036
          %1040 = vset.pattern.permute.xlu0 0
          %1041 = vperm.xlu0 %1040, %v702
          %v1042 = vpop.permute.xlu0 %1041
          %v1044 = vmul.f32 %v838, %v967
          %v1045 = vmul.f32 %v843, %v972
          %v1046 = vmul.f32 %v848, %v977
          %v1047 = vmul.f32 %v853, %v982
          %v1048 = vmul.f32 %v858, %v987
          %v1049 = vmul.f32 %v863, %v992
          %v1050 = vmul.f32 %v868, %v997
          %v1051 = vmul.f32 %v873, %v1002
          %v1052 = vmul.f32 %v878, %v1007
          %v1053 = vmul.f32 %v883, %v1012
          %v1054 = vmul.f32 %v888, %v1017
          %v1055 = vmul.f32 %v893, %v1022
          %v1056 = vmul.f32 %v898, %v1027
          %v1057 = vmul.f32 %v903, %v1032
          %v1058 = vmul.f32 %v908, %v1037
          %v1059 = vmul.f32 %v913, %v1042
          %v1060 = vld [vmem:[%s3] sm:$0x1]
          %v1062 = vlaneseq
          %v1063 = vshrl.u32 %v1062, 7
          %v1064 = vsub.s32 0, %v1063
          %v1065 = vrot.slane %v1060, %v1064
          %1068 = vset.pattern.permute.xlu0 0
          %1069 = vperm.xlu0 %1068, %v948
          %v1070 = vpop.permute.xlu0 %1069
          %1073 = vset.pattern.permute.xlu0 0
          %1074 = vperm.xlu0 %1073, %v949
          %v1075 = vpop.permute.xlu0 %1074
          %1078 = vset.pattern.permute.xlu0 0
          %1079 = vperm.xlu0 %1078, %v950
          %v1080 = vpop.permute.xlu0 %1079
          %1083 = vset.pattern.permute.xlu0 0
          %1084 = vperm.xlu0 %1083, %v951
          %v1085 = vpop.permute.xlu0 %1084
          %1088 = vset.pattern.permute.xlu0 0
          %1089 = vperm.xlu0 %1088, %v952
          %v1090 = vpop.permute.xlu0 %1089
          %1093 = vset.pattern.permute.xlu0 0
          %1094 = vperm.xlu0 %1093, %v953
          %v1095 = vpop.permute.xlu0 %1094
          %1098 = vset.pattern.permute.xlu0 0
          %1099 = vperm.xlu0 %1098, %v954
          %v1100 = vpop.permute.xlu0 %1099
          %1103 = vset.pattern.permute.xlu0 0
          %1104 = vperm.xlu0 %1103, %v955
          %v1105 = vpop.permute.xlu0 %1104
          %1108 = vset.pattern.permute.xlu0 0
          %1109 = vperm.xlu0 %1108, %v956
          %v1110 = vpop.permute.xlu0 %1109
          %1113 = vset.pattern.permute.xlu0 0
          %1114 = vperm.xlu0 %1113, %v957
          %v1115 = vpop.permute.xlu0 %1114
          %1118 = vset.pattern.permute.xlu0 0
          %1119 = vperm.xlu0 %1118, %v958
          %v1120 = vpop.permute.xlu0 %1119
          %1123 = vset.pattern.permute.xlu0 0
          %1124 = vperm.xlu0 %1123, %v959
          %v1125 = vpop.permute.xlu0 %1124
          %1128 = vset.pattern.permute.xlu0 0
          %1129 = vperm.xlu0 %1128, %v960
          %v1130 = vpop.permute.xlu0 %1129
          %1133 = vset.pattern.permute.xlu0 0
          %1134 = vperm.xlu0 %1133, %v961
          %v1135 = vpop.permute.xlu0 %1134
          %1138 = vset.pattern.permute.xlu0 0
          %1139 = vperm.xlu0 %1138, %v962
          %v1140 = vpop.permute.xlu0 %1139
          %1143 = vset.pattern.permute.xlu0 0
          %1144 = vperm.xlu0 %1143, %v963
          %v1145 = vpop.permute.xlu0 %1144
          %v1147 = vmul.f32 %v1065, %v1070
          %v1148 = vmul.f32 %v1065, %v1075
          %v1149 = vmul.f32 %v1065, %v1080
          %v1150 = vmul.f32 %v1065, %v1085
          %v1151 = vmul.f32 %v1065, %v1090
          %v1152 = vmul.f32 %v1065, %v1095
          %v1153 = vmul.f32 %v1065, %v1100
          %v1154 = vmul.f32 %v1065, %v1105
          %v1155 = vmul.f32 %v1065, %v1110
          %v1156 = vmul.f32 %v1065, %v1115
          %v1157 = vmul.f32 %v1065, %v1120
          %v1158 = vmul.f32 %v1065, %v1125
          %v1159 = vmul.f32 %v1065, %v1130
          %v1160 = vmul.f32 %v1065, %v1135
          %v1161 = vmul.f32 %v1065, %v1140
          %v1162 = vmul.f32 %v1065, %v1145
          %v1163 = vadd.f32 %v1044, %v1147
          %v1164 = vadd.f32 %v1045, %v1148
          %v1165 = vadd.f32 %v1046, %v1149
          %v1166 = vadd.f32 %v1047, %v1150
          %v1167 = vadd.f32 %v1048, %v1151
          %v1168 = vadd.f32 %v1049, %v1152
          %v1169 = vadd.f32 %v1050, %v1153
          %v1170 = vadd.f32 %v1051, %v1154
          %v1171 = vadd.f32 %v1052, %v1155
          %v1172 = vadd.f32 %v1053, %v1156
          %v1173 = vadd.f32 %v1054, %v1157
          %v1174 = vadd.f32 %v1055, %v1158
          %v1175 = vadd.f32 %v1056, %v1159
          %v1176 = vadd.f32 %v1057, %v1160
          %v1177 = vadd.f32 %v1058, %v1161
          %v1178 = vadd.f32 %v1059, %v1162
          %v1179 = vpack.c.bf16 %v1164, %v1163
          %v1180 = vpack.c.bf16 %v1166, %v1165
          %v1181 = vpack.c.bf16 %v1168, %v1167
          %v1182 = vpack.c.bf16 %v1170, %v1169
          %v1183 = vpack.c.bf16 %v1172, %v1171
          %v1184 = vpack.c.bf16 %v1174, %v1173
          %v1185 = vpack.c.bf16 %v1176, %v1175
          %v1186 = vpack.c.bf16 %v1178, %v1177
          %v1195 = vunpack.c.l.b16 %v1179
          %v1196 = vunpack.c.h.b16 %v1179
          %v1197 = vunpack.c.l.b16 %v1180
          %v1198 = vunpack.c.h.b16 %v1180
          %v1199 = vunpack.c.l.b16 %v1181
          %v1200 = vunpack.c.h.b16 %v1181
          %v1201 = vunpack.c.l.b16 %v1182
          %v1202 = vunpack.c.h.b16 %v1182
          %v1203 = vunpack.c.l.b16 %v1183
          %v1204 = vunpack.c.h.b16 %v1183
          %v1205 = vunpack.c.l.b16 %v1184
          %v1206 = vunpack.c.h.b16 %v1184
          %v1207 = vunpack.c.l.b16 %v1185
          %v1208 = vunpack.c.h.b16 %v1185
          %v1209 = vunpack.c.l.b16 %v1186
          %v1210 = vunpack.c.h.b16 %v1186
          %v1211 = vpack.c.b16 %v1195, %v1195
          %v1212 = vpack.c.b16 %v1196, %v1196
          %v1213 = vpack.c.b16 %v1197, %v1197
          %v1214 = vpack.c.b16 %v1198, %v1198
          %v1215 = vpack.c.b16 %v1199, %v1199
          %v1216 = vpack.c.b16 %v1200, %v1200
          %v1217 = vpack.c.b16 %v1201, %v1201
          %v1218 = vpack.c.b16 %v1202, %v1202
          %v1219 = vpack.c.b16 %v1203, %v1203
          %v1220 = vpack.c.b16 %v1204, %v1204
          %v1221 = vpack.c.b16 %v1205, %v1205
          %v1222 = vpack.c.b16 %v1206, %v1206
          %v1223 = vpack.c.b16 %v1207, %v1207
          %v1224 = vpack.c.b16 %v1208, %v1208
          %v1225 = vpack.c.b16 %v1209, %v1209
          %v1226 = vpack.c.b16 %v1210, %v1210
          %1243 = vst [vmem:[%s372] sm:$0xf] %v1211
          %1244 = vst [vmem:[%s372 + $0x4] sm:$0xf] %v1212
          %1245 = vst [vmem:[%s372 + $0x8] sm:$0xf] %v1213
          %1246 = vst [vmem:[%s372 + $0xc] sm:$0xf] %v1214
          %1247 = vst [vmem:[%s372 + $0x10] sm:$0xf] %v1215
          %1248 = vst [vmem:[%s372 + $0x14] sm:$0xf] %v1216
          %1249 = vst [vmem:[%s372 + $0x18] sm:$0xf] %v1217
          %1250 = vst [vmem:[%s372 + $0x1c] sm:$0xf] %v1218
          %1251 = vst [vmem:[%s372 + $0x20] sm:$0xf] %v1219
          %1252 = vst [vmem:[%s372 + $0x24] sm:$0xf] %v1220
          %1253 = vst [vmem:[%s372 + $0x28] sm:$0xf] %v1221
          %1254 = vst [vmem:[%s372 + $0x2c] sm:$0xf] %v1222
          %1255 = vst [vmem:[%s372 + $0x30] sm:$0xf] %v1223
          %1256 = vst [vmem:[%s372 + $0x34] sm:$0xf] %v1224
          %1257 = vst [vmem:[%s372 + $0x38] sm:$0xf] %v1225
          %1258 = vst [vmem:[%s372 + $0x3c] sm:$0xf] %v1226
        $region89: #{tpu_custom_call.1} parent=76 // pred_fallthru
          _
        %s1259 = sand.u32 %s161, 1
        %s1260 = scalar_lea.sflag [#allocation5], %s1259
        %s1261 = sand.u32 %s161, 1
        %s1262 = smul.addr %s1261, 64
        %s1263 = scalar_lea.vmem [#allocation4], %s1262
        // Predicated region
        $region90: #{tpu_custom_call.1} parent=76 // pred_check
          %p1264 = pneg %p171
        $region91: #{tpu_custom_call.1} parent=76 // pred_check_branch
          %1266 = sbr.rel (%p1264) target = $region93
        $region92: #{tpu_custom_call.1} parent=76 // pred_region
          %s1267 = smul.u32 16, %s23
          %s1269 = ssub.s32 1024, 1024
          %1270 = vsyncadd %s1260, %s1269
          %s1271 = smul.addr %s1267, 64
          %s1272 = scalar_lea.hbm %s5, %s1271
          %s1273 = sshll.u32 %s1263, 4
          %s1274 = int_to_ptr.vmem [resolvable:$true] %s1273
          %1279 = dma.vmem_to_hbm [thread:$0]  %s1274, 1024, %s1272, %s1260, 64, 64, 4
        $region93: #{tpu_custom_call.1} parent=76 // pred_fallthru
          _
      $region77: #{tpu_custom_call.1} parent=5 // pred_fallthru
        _
      %p1280 = scmp.le.s32.totalorder 2, %s14
      // Predicated region
      $region94: #{tpu_custom_call.1} parent=5 // pred_check
        %p1281 = pneg %p1280
      $region95: #{tpu_custom_call.1} parent=5 // pred_check_branch
        %1283 = sbr.rel (%p1281) target = $region97
      $region96: #{tpu_custom_call.1} parent=5 // pred_region
        %s1284 = ssub.s32 %s14, 2
        // Predicated region
        $region98: #{tpu_custom_call.1} parent=96 // pred_check
          %p1285 = pneg %p177
        $region99: #{tpu_custom_call.1} parent=96 // pred_check_branch
          %1287 = sbr.rel (%p1285) target = $region101
        $region100: #{tpu_custom_call.1} parent=96 // pred_region
          %s1288 = sand.u32 %s162, 1
          %s1289 = scalar_lea.sflag [#allocation5], %s1288
          %s1290 = sand.u32 %s162, 1
          %s1291 = smul.addr %s1290, 64
          %s1292 = scalar_lea.vmem [#allocation4], %s1291
          %1293 = dma.done %s1289, 1024
        $region101: #{tpu_custom_call.1} parent=96 // pred_fallthru
          _
      $region97: #{tpu_custom_call.1} parent=5 // pred_fallthru
        _
    $region6: #{tpu_custom_call.1} parent=1 // loop_footer
      %s18 = sadd.s32 1, %s14
    $region7: #{tpu_custom_call.1} parent=1 // loop_footer_branch
      %13 = sbr.rel target = $region3
    $region8: #{tpu_custom_call.1} parent=1 // loop_exit
      _
    %1294 = vsyncpa [#allocation5], 1
    %s1295 = scalar_lea.sflag [#allocation5], 1
    %1296 = vsyncpa %s1295, 1

</llo_original>
